<compile_context>
chip_gen: v5e
topology: v5e:2x2
jax: 0.10.0
libtpu: 0.0.40
codegen_flags: <defaults>
</compile_context>

<pallas_src>
import numpy as np
import jax
import jax.numpy as jnp
from jax.experimental import pallas as pl
from jax.experimental.pallas import tpu as pltpu


# ----------------------------- configuration --------------------------------
H = 32            # n_hidden_channels (count of 0e == count of 1o)
HIDDEN = 16       # default neurons_per_layer=[16] when fc_kwargs == {}
N = 256           # number of nodes (demo size)


def _silu_normalize2mom_const() -> float:
    """e3nn normalize2mom constant for SiLU: 1 / sqrt(E[silu(x)^2]), x~N(0,1)."""
    xs = np.linspace(-12.0, 12.0, 400001, dtype=np.float64)
    dx = xs[1] - xs[0]
    pdf = np.exp(-0.5 * xs * xs) / np.sqrt(2.0 * np.pi)
    silu = xs / (1.0 + np.exp(-xs))
    second_moment = float(np.sum(silu * silu * pdf) * dx)
    return float(1.0 / np.sqrt(second_moment))
# TODO(synk): e3nn's normalize2mom uses a fixed-seed Monte-Carlo estimate; this
# deterministic quadrature constant can differ from PyTorch at the ~1e-3 level.


SILU_NORM = _silu_normalize2mom_const()


# ------------------------------- kernel --------------------------------------
def _make_kernel(h: int):
    def kernel(x_ref, w1_ref, tb_ref, w2_ref, o_ref):
        # Full-lane load, single f32 cast; reused by the matmul and the gate.
        xf = x_ref[...].astype(jnp.float32)                        # (TN, 4H)

        # fc layer 1: W1 zero-padded to (4H, HIDDEN) in the wrapper, so the
        # matmul consumes the full-lane x tile (no sub-vreg lane slice here);
        # 1/sqrt(fan_in) is folded into the weights and the timestep
        # contribution is a precomputed bias.
        z = jnp.dot(xf, w1_ref[...],
                    preferred_element_type=jnp.float32) + tb_ref[...]
        # SiLU (normalize2mom constant folded into W2).
        z = z * jax.lax.logistic(z)

        # fc layer 2 + gate expansion (+ fan-in / norm constants), all folded
        # into w2_ref (HIDDEN, 3H).
        g = jnp.dot(z, w2_ref[...],
                    preferred_element_type=jnp.float32)            # (TN, 3H)

        # Gate (identity on gate scalars): vectors * expanded gates, written
        # directly as the (TN, 3H) output tile -- no padded slab, no wrapper
        # slice, no second HBM pass.
        o_ref[...] = (xf[:, h:] * g).astype(o_ref.dtype)

    return kernel


# ------------------------------- wrapper --------------------------------------
def forecast_horizon_conditioning(x, t_emb, w1, w2, *, tn=None):
    """x: (N, 4H) node features (f32 or bf16), t_emb: (1, H) f32,
    w1: (2H, HIDDEN), w2: (HIDDEN, H). Returns (N, 3H) gated vectors (Hx1o)."""
    n, feat = x.shape
    h = t_emb.shape[-1]
    hidden = w1.shape[1]
    assert feat == 4 * h and w1.shape[0] == 2 * h and w2.shape == (hidden, h)

    if tn is None:
        # HBM-bound kernel, ~0.35 us fixed cost per grid step -> big tiles;
        # but keep >= 2 "parallel" grid steps when possible so both v7x
        # TensorCores get work.  4096-row f32 tiles double-buffered (in+out)
        # stay well under even v5e's scoped-VMEM limit we set below.
        target = min(4096, n if n <= 16 else n // 2)
        tn = next((d for d in range(target, 0, -1) if n % d == 0), n)
        if tn % 8 != 0 and tn != n:
            tn = n                       # keep the (8,128) tiling rule happy
    assert n % tn == 0

    inv_sqrt_fan1 = 1.0 / float(np.sqrt(2 * h))      # fan_in of fc layer 1
    inv_sqrt_fan2 = 1.0 / float(np.sqrt(hidden))     # fan_in of fc layer 2

    # ---- grid-invariant algebra done ONCE in the wrapper (tiny XLA ops) ----
    w1f = w1.astype(jnp.float32)
    w2f = w2.astype(jnp.float32)
    # Scalar rows scaled by 1/sqrt(fan_in), vector rows zero-padded so the
    # kernel matmul can consume the full (TN, 4H) tile without lane-slicing.
    # TODO(synk): with zero-padded W1, non-finite values in the vector
    # channels would propagate NaN into z (0*inf); harmless for finite inputs.
    w1_pad = jnp.concatenate(
        [w1f[:h] * inv_sqrt_fan1, jnp.zeros((3 * h, hidden), jnp.float32)],
        axis=0)                                                     # (4H, HIDDEN)
    # Timestep contribution hoisted to a per-call bias (same for every node).
    t_bias = (t_emb.astype(jnp.float32) @ w1f[h:]) * inv_sqrt_fan1  # (1, HIDDEN)
    # Gate expansion (each gate scalar repeated over its 3 vector components)
    # and fan-in / normalize2mom constants folded into the second layer.
    w2_exp = jnp.repeat(w2f, 3, axis=1) * (inv_sqrt_fan2 * SILU_NORM)  # (HIDDEN, 3H)

    grid_spec = pltpu.PrefetchScalarGridSpec(
        num_scalar_prefetch=0,
        grid=(n // tn,),
        in_specs=[
            pl.BlockSpec((tn, 4 * h), lambda i: (i, 0)),        # node features
            pl.BlockSpec((4 * h, hidden), lambda i: (0, 0)),    # padded/scaled W1
            pl.BlockSpec((1, hidden), lambda i: (0, 0)),        # timestep bias
            pl.BlockSpec((hidden, 3 * h), lambda i: (0, 0)),    # folded W2 (gate)
        ],
        out_specs=pl.BlockSpec((tn, 3 * h), lambda i: (i, 0)),  # direct (N,3H)
    )

    itemsize = int(x.dtype.itemsize)
    cost = pl.CostEstimate(
        flops=int(2 * n * 4 * h * hidden            # first matmul
                  + 2 * n * hidden * 3 * h          # second matmul
                  + n * (3 * h + 2 * hidden)),      # gating mul + SiLU mul/add
        transcendentals=int(n * hidden),            # logistic per hidden unit
        bytes_accessed=int(n * (4 * h + 3 * h) * itemsize
                           + 4 * (4 * h * hidden + hidden + hidden * 3 * h)),
    )

    return pl.pallas_call(
        _make_kernel(h),
        out_shape=jax.ShapeDtypeStruct((n, 3 * h), x.dtype),
        grid_spec=grid_spec,
        compiler_params=pltpu.CompilerParams(
            dimension_semantics=("parallel",),
            # Explicit headroom so large tiles never trip v5e's 16 MiB scoped
            # default; 32 MiB is safe on v5e/v6e (128 MiB) and v7x (64 MiB).
            vmem_limit_bytes=32 * 1024 * 1024),
        cost_estimate=cost,
    )(x, w1_pad, t_bias, w2_exp)


# --------------------------- pure-JAX reference -------------------------------
def _reference(x, t_emb, w1, w2):
    h = t_emb.shape[-1]
    scal = x[:, :h]
    vec = x[:, h:]
    z = jnp.concatenate(
        [scal, jnp.broadcast_to(t_emb, (x.shape[0], h))], axis=1)
    z = z @ w1 / np.sqrt(2 * h)
    z = jax.nn.silu(z) * SILU_NORM
    g = z @ w2 / np.sqrt(w1.shape[1])
    return vec * jnp.repeat(g, 3, axis=1)


# --------------------------------- main ---------------------------------------
if __name__ == "__main__":
    key = jax.random.PRNGKey(0)
    kx, kt, kw1, kw2 = jax.random.split(key, 4)

    # Deterministic synthetic parameters (e3nn initializes weights ~ N(0,1)).
    x = jax.random.normal(kx, (N, 4 * H), dtype=jnp.float32)       # node feats
    t_emb = jax.random.normal(kt, (1, H), dtype=jnp.float32)       # horizon emb
    w1 = jax.random.normal(kw1, (2 * H, HIDDEN), dtype=jnp.float32)
    w2 = jax.random.normal(kw2, (HIDDEN, H), dtype=jnp.float32)

    ref = _reference(x, t_emb, w1, w2)

    # f32 path (parity with reference); default tile = 128 rows -> 2 parallel
    # grid steps (exercises the multi-step / megacore path).
    out = jax.block_until_ready(
        forecast_horizon_conditioning(x, t_emb, w1, w2))
    assert out.shape == (N, 3 * H)
    np.testing.assert_allclose(np.asarray(out), np.asarray(ref),
                               rtol=1e-5, atol=1e-5)

    # bf16 HBM-I/O path (bandwidth optimization, esp. v5e); compute stays f32.
    out_bf16 = jax.block_until_ready(
        forecast_horizon_conditioning(x.astype(jnp.bfloat16), t_emb, w1, w2))
    max_err = float(jnp.max(jnp.abs(out_bf16.astype(jnp.float32) - ref)))
    assert max_err < 0.3, f"bf16 path max abs err too large: {max_err}"

    print("KERNEL_OK")
</pallas_src>

<mosaic_0001>
module attributes {stable_mosaic.version = 11 : i64} {
  func.func @kernel(%arg0: i32, %arg1: memref<128x128xf32, #tpu.memory_space<vmem>>, %arg2: memref<128x16xf32, #tpu.memory_space<vmem>>, %arg3: memref<1x16xf32, #tpu.memory_space<vmem>>, %arg4: memref<16x96xf32, #tpu.memory_space<vmem>>, %arg5: memref<128x96xf32, #tpu.memory_space<vmem>>) attributes {dimension_semantics = [#tpu.dimension_semantics<parallel>], iteration_bounds = array<i64: 2>, scalar_prefetch = 0 : i64, scratch_operands = 0 : i64, tpu.core_type = #tpu.core_type<tc>, window_params = [{transform_indices = @transform_0, window_bounds = array<i64: 128, 128>}, {pipeline_mode = #tpu.pipeline_mode<synchronous>, transform_indices = @transform_1, window_bounds = array<i64: 128, 16>}, {pipeline_mode = #tpu.pipeline_mode<synchronous>, transform_indices = @transform_2, window_bounds = array<i64: 1, 16>}, {pipeline_mode = #tpu.pipeline_mode<synchronous>, transform_indices = @transform_3, window_bounds = array<i64: 16, 96>}, {transform_indices = @transform_4, window_bounds = array<i64: 128, 96>}]} {
    %c0 = arith.constant 0 : index
    %c0_0 = arith.constant 0 : index
    %0 = vector.load %arg1[%c0, %c0_0] : memref<128x128xf32, #tpu.memory_space<vmem>>, vector<128x128xf32>
    %c0_1 = arith.constant 0 : index
    %c0_2 = arith.constant 0 : index
    %1 = vector.load %arg2[%c0_1, %c0_2] : memref<128x16xf32, #tpu.memory_space<vmem>>, vector<128x16xf32>
    %cst = arith.constant dense<0.000000e+00> : vector<128x16xf32>
    %2 = tpu.matmul %0, %1, %cst {dimension_numbers = #tpu.dot_dimension_numbers<[1], [0], [0], [1], [0, 0, 1, 1], [], []>} : vector<128x128xf32>, vector<128x16xf32>, vector<128x16xf32> -> vector<128x16xf32>
    %c0_3 = arith.constant 0 : index
    %c0_4 = arith.constant 0 : index
    %3 = vector.load %arg3[%c0_3, %c0_4] : memref<1x16xf32, #tpu.memory_space<vmem>>, vector<1x16xf32>
    %4 = vector.broadcast %3 : vector<1x16xf32> to vector<128x16xf32>
    %5 = arith.addf %2, %4 : vector<128x16xf32>
    %6 = arith.negf %5 : vector<128x16xf32>
    %7 = math.exp %6 : vector<128x16xf32>
    %cst_5 = arith.constant 1.000000e+00 : f32
    %8 = vector.broadcast %cst_5 : f32 to vector<128x16xf32>
    %9 = arith.addf %8, %7 : vector<128x16xf32>
    %10 = arith.divf %8, %9 : vector<128x16xf32>
    %11 = arith.mulf %5, %10 : vector<128x16xf32>
    %c0_6 = arith.constant 0 : index
    %c0_7 = arith.constant 0 : index
    %12 = vector.load %arg4[%c0_6, %c0_7] : memref<16x96xf32, #tpu.memory_space<vmem>>, vector<16x96xf32>
    %cst_8 = arith.constant dense<0.000000e+00> : vector<128x96xf32>
    %13 = tpu.matmul %11, %12, %cst_8 {dimension_numbers = #tpu.dot_dimension_numbers<[1], [0], [0], [1], [0, 0, 1, 1], [], []>} : vector<128x16xf32>, vector<16x96xf32>, vector<128x96xf32> -> vector<128x96xf32>
    %14 = vector.extract_strided_slice %0 {offsets = [0, 32], sizes = [128, 96], strides = [1, 1]} : vector<128x128xf32> to vector<128x96xf32>
    %15 = arith.mulf %14, %13 : vector<128x96xf32>
    %c0_9 = arith.constant 0 : index
    %c0_10 = arith.constant 0 : index
    %16 = vector.load %arg5[%c0_9, %c0_10] : memref<128x96xf32, #tpu.memory_space<vmem>>, vector<128x96xf32>
    tpu.vector_store %arg5[%c0_9, %c0_10], %15 {strides = array<i32>} : memref<128x96xf32, #tpu.memory_space<vmem>>, vector<128x96xf32>,
    return
  }
  func.func @transform_0(%arg0: i32) -> (i32, i32) {
    %c0_i32 = arith.constant 0 : i32
    %c0_i32_0 = arith.constant 0 : i32
    return %arg0, %c0_i32 : i32, i32
  }
  func.func @transform_1(%arg0: i32) -> (i32, i32) {
    %c0_i32 = arith.constant 0 : i32
    %c0_i32_0 = arith.constant 0 : i32
    %c0_i32_1 = arith.constant 0 : i32
    return %c0_i32, %c0_i32_0 : i32, i32
  }
  func.func @transform_2(%arg0: i32) -> (i32, i32) {
    %c0_i32 = arith.constant 0 : i32
    %c0_i32_0 = arith.constant 0 : i32
    %c0_i32_1 = arith.constant 0 : i32
    return %c0_i32, %c0_i32_0 : i32, i32
  }
  func.func @transform_3(%arg0: i32) -> (i32, i32) {
    %c0_i32 = arith.constant 0 : i32
    %c0_i32_0 = arith.constant 0 : i32
    %c0_i32_1 = arith.constant 0 : i32
    return %c0_i32, %c0_i32_0 : i32, i32
  }
  func.func @transform_4(%arg0: i32) -> (i32, i32) {
    %c0_i32 = arith.constant 0 : i32
    %c0_i32_0 = arith.constant 0 : i32
    return %arg0, %c0_i32 : i32, i32
  }
}

</mosaic_0001>

<llo_original>
// kernel: tpu_custom_call.1
$region0: #{tpu_custom_call.1}
  #allocation0 [shape = 'u32[]', space=smem, size = 0x4, offset = 0x4, fixed_abs, tag = 'smem constant byte address 0x4 - core index']
  #allocation1 [shape = 'u32[72,128]{1,0:T(1,128)}', space=vmem, size = 0x9000, scoped, tag = 'internal scratch']
  %s0 = inlined_call_operand.hbm [shape: f32[256,128], index: 0, kind: input, shape index: {}]
  %s1 = inlined_call_operand.vmem [shape: f32[128,16], index: 1, kind: input, shape index: {}]
  %s2 = inlined_call_operand.vmem [shape: f32[1,16], index: 2, kind: input, shape index: {}]
  %s3 = inlined_call_operand.vmem [shape: f32[16,96], index: 3, kind: input, shape index: {}]
  %s4 = inlined_call_operand.vmem [shape: f32[256,96], index: 4, kind: output, shape index: {}]
  %s5 = sld [smem:[#allocation0]]
  $region53: #{tpu_custom_call.1} parent=0
    _
  %s7 = ssub.s32 1, %s5
  %s8 = scalar_select 0, %s7, %s5
  $region1: #{tpu_custom_call.1} parent=0
    #allocation2 [shape = 'u8[131072]{0}', space=vmem, size = 0x20000, scoped, tag = 'input window, operand 0']
    #allocation3 [shape = 's32[2]{0}', space=sflag, size = 0x8, scoped, tag = 'scoped memory for tpu_custom_call.1']
    %9 = vsyncpa [#allocation3], 0
    %s10 = scalar_lea.sflag [#allocation3], 1
    %11 = vsyncpa %s10, 0
    loop: start=0, step=1, limit=4
    $region2: #{tpu_custom_call.1} parent=1 // loop_pre_header
      _
    $region3: #{tpu_custom_call.1} parent=1 // loop_header
      %s13 = sphi 0, %s17
      %p14 = scmp.ge.s32.totalorder %s13, 4
      %s23 = sphi 0, %s25
      %s26 = sphi 0, %s23
      %s27 = sphi 0, %s26
      %s43 = sphi 0, %s27
      %s47 = sphi 0, %s47
      %s49 = sphi 0, %s47
      %s50 = sphi 0, %s49
      %s64 = sphi 0, %s50
      %s68 = sphi 0, %s68
      %s70 = sphi 0, %s68
      %s71 = sphi 0, %s70
      %s85 = sphi 0, %s71
      %s89 = sphi 0, %s89
      %s91 = sphi 0, %s89
      %s92 = sphi 0, %s91
      %s106 = sphi 0, %s92
      %s112 = sphi 0, %s114
      %s115 = sphi 0, %s112
      %s116 = sphi 0, %s115
      %s132 = sphi 0, %s116
    $region4: #{tpu_custom_call.1} parent=1 // loop_header_branch
      %16 = sbr.rel (%p14) target = $region8
    $region5: #{tpu_custom_call.1} parent=1 // loop_body
      %s18 = ssub.s32 %s13, 1
      %s19 = ssub.s32 %s13, 2
      %s20 = sadd.s32 %s13, 1
      %s21 = ssub.s32 %s13, %s20
      %p22 = scmp.eq.s32.totalorder %s21, 0
      %s24 = sadd.s32 %s23, 1
      %s25 = scalar_select %p22, %s23, %s24
      %p28 = pneg %p22
      %p29 = scmp.eq.s32.totalorder %s13, 1
      %p30 = por %p28, %p29
      %p31 = scmp.ne.s32.totalorder %s23, %s26
      %p32 = scmp.eq.s32.totalorder %s13, 0
      %p33 = por %p31, %p32
      %p34 = scmp.ne.s32.totalorder %s23, %s26
      %p35 = scmp.eq.s32.totalorder %s18, 1
      %p36 = por %p34, %p35
      %p37 = scmp.ne.s32.totalorder %s26, %s27
      %p38 = scmp.eq.s32.totalorder %s18, 0
      %p39 = por %p37, %p38
      %p40 = scmp.ne.s32.totalorder %s26, %s27
      %p41 = scmp.eq.s32.totalorder %s19, 1
      %p42 = por %p40, %p41
      %p44 = scmp.ne.s32.totalorder %s27, %s43
      %p45 = scmp.eq.s32.totalorder %s19, 0
      %p46 = por %p44, %p45
      %s48 = sadd.s32 %s47, 1
      %p51 = scmp.eq.s32.totalorder %s13, 1
      %p52 = scmp.ne.s32.totalorder %s47, %s49
      %p53 = scmp.eq.s32.totalorder %s13, 0
      %p54 = por %p52, %p53
      %p55 = scmp.ne.s32.totalorder %s47, %s49
      %p56 = scmp.eq.s32.totalorder %s18, 1
      %p57 = por %p55, %p56
      %p58 = scmp.ne.s32.totalorder %s49, %s50
      %p59 = scmp.eq.s32.totalorder %s18, 0
      %p60 = por %p58, %p59
      %p61 = scmp.ne.s32.totalorder %s49, %s50
      %p62 = scmp.eq.s32.totalorder %s19, 1
      %p63 = por %p61, %p62
      %p65 = scmp.ne.s32.totalorder %s50, %s64
      %p66 = scmp.eq.s32.totalorder %s19, 0
      %p67 = por %p65, %p66
      %s69 = sadd.s32 %s68, 1
      %p72 = scmp.eq.s32.totalorder %s13, 1
      %p73 = scmp.ne.s32.totalorder %s68, %s70
      %p74 = scmp.eq.s32.totalorder %s13, 0
      %p75 = por %p73, %p74
      %p76 = scmp.ne.s32.totalorder %s68, %s70
      %p77 = scmp.eq.s32.totalorder %s18, 1
      %p78 = por %p76, %p77
      %p79 = scmp.ne.s32.totalorder %s70, %s71
      %p80 = scmp.eq.s32.totalorder %s18, 0
      %p81 = por %p79, %p80
      %p82 = scmp.ne.s32.totalorder %s70, %s71
      %p83 = scmp.eq.s32.totalorder %s19, 1
      %p84 = por %p82, %p83
      %p86 = scmp.ne.s32.totalorder %s71, %s85
      %p87 = scmp.eq.s32.totalorder %s19, 0
      %p88 = por %p86, %p87
      %s90 = sadd.s32 %s89, 1
      %p93 = scmp.eq.s32.totalorder %s13, 1
      %p94 = scmp.ne.s32.totalorder %s89, %s91
      %p95 = scmp.eq.s32.totalorder %s13, 0
      %p96 = por %p94, %p95
      %p97 = scmp.ne.s32.totalorder %s89, %s91
      %p98 = scmp.eq.s32.totalorder %s18, 1
      %p99 = por %p97, %p98
      %p100 = scmp.ne.s32.totalorder %s91, %s92
      %p101 = scmp.eq.s32.totalorder %s18, 0
      %p102 = por %p100, %p101
      %p103 = scmp.ne.s32.totalorder %s91, %s92
      %p104 = scmp.eq.s32.totalorder %s19, 1
      %p105 = por %p103, %p104
      %p107 = scmp.ne.s32.totalorder %s92, %s106
      %p108 = scmp.eq.s32.totalorder %s19, 0
      %p109 = por %p107, %p108
      %s110 = ssub.s32 %s13, %s20
      %p111 = scmp.eq.s32.totalorder %s110, 0
      %s113 = sadd.s32 %s112, 1
      %s114 = scalar_select %p111, %s112, %s113
      %p117 = pneg %p111
      %p118 = scmp.eq.s32.totalorder %s13, 1
      %p119 = por %p117, %p118
      %p120 = scmp.ne.s32.totalorder %s112, %s115
      %p121 = scmp.eq.s32.totalorder %s13, 0
      %p122 = por %p120, %p121
      %p123 = scmp.ne.s32.totalorder %s112, %s115
      %p124 = scmp.eq.s32.totalorder %s18, 1
      %p125 = por %p123, %p124
      %p126 = scmp.ne.s32.totalorder %s115, %s116
      %p127 = scmp.eq.s32.totalorder %s18, 0
      %p128 = por %p126, %p127
      %p129 = scmp.ne.s32.totalorder %s115, %s116
      %p130 = scmp.eq.s32.totalorder %s19, 1
      %p131 = por %p129, %p130
      %p133 = scmp.ne.s32.totalorder %s116, %s132
      %p134 = scmp.eq.s32.totalorder %s19, 0
      %p135 = por %p133, %p134
      %p136 = scmp.le.s32.totalorder 1, %s13
      %p137 = scmp.lt.s32.totalorder %s13, 3
      %p138 = pnand %p136, %p137
      %p139 = pneg %p138
      // Predicated region
      $region9: #{tpu_custom_call.1} parent=5 // pred_check
        _
      $region10: #{tpu_custom_call.1} parent=5 // pred_check_branch
        %141 = sbr.rel (%p138) target = $region12
      $region11: #{tpu_custom_call.1} parent=5 // pred_region
        %s142 = ssub.s32 %s13, 1
        // Predicated region
        $region13: #{tpu_custom_call.1} parent=11 // pred_check
          %p143 = pneg %p60
        $region14: #{tpu_custom_call.1} parent=11 // pred_check_branch
          %145 = sbr.rel (%p143) target = $region16
        $region15: #{tpu_custom_call.1} parent=11 // pred_region
          _
        $region16: #{tpu_custom_call.1} parent=11 // pred_fallthru
          _
        // Predicated region
        $region17: #{tpu_custom_call.1} parent=11 // pred_check
          %p146 = pneg %p81
        $region18: #{tpu_custom_call.1} parent=11 // pred_check_branch
          %148 = sbr.rel (%p146) target = $region20
        $region19: #{tpu_custom_call.1} parent=11 // pred_region
          _
        $region20: #{tpu_custom_call.1} parent=11 // pred_fallthru
          _
        // Predicated region
        $region21: #{tpu_custom_call.1} parent=11 // pred_check
          %p149 = pneg %p102
        $region22: #{tpu_custom_call.1} parent=11 // pred_check_branch
          %151 = sbr.rel (%p149) target = $region24
        $region23: #{tpu_custom_call.1} parent=11 // pred_region
          _
        $region24: #{tpu_custom_call.1} parent=11 // pred_fallthru
          _
      $region12: #{tpu_custom_call.1} parent=5 // pred_fallthru
        _
      %p152 = scmp.lt.s32.totalorder %s13, 2
      // Predicated region
      $region25: #{tpu_custom_call.1} parent=5 // pred_check
        %p153 = pneg %p152
      $region26: #{tpu_custom_call.1} parent=5 // pred_check_branch
        %155 = sbr.rel (%p153) target = $region28
      $region27: #{tpu_custom_call.1} parent=5 // pred_region
        // Predicated region
        $region29: #{tpu_custom_call.1} parent=27 // pred_check
          %p156 = pneg %p33
        $region30: #{tpu_custom_call.1} parent=27 // pred_check_branch
          %158 = sbr.rel (%p156) target = $region32
        $region31: #{tpu_custom_call.1} parent=27 // pred_region
          %s159 = sand.u32 %s23, 1
          %s160 = scalar_lea.sflag [#allocation3], %s159
          %s161 = sand.u32 %s23, 1
          %s162 = smul.addr %s161, 128
          %s163 = scalar_lea.vmem [#allocation2], %s162
          %s164 = smul.u32 16, %s13
          %166 = vsyncadd %s160, 0
          %s167 = smul.addr %s164, 8
          %s168 = scalar_lea.hbm %s0, %s167
          %s169 = sshll.u32 %s168, 4
          %s170 = int_to_ptr.hbm [resolvable:$true] %s169
          %s171 = sshll.u32 %s163, 4
          %s172 = int_to_ptr.vmem [resolvable:$true] %s171
          %177 = dma.hbm_to_vmem [thread:$0]  %s170, 2048, %s172, %s160, 128, 128, 8
        $region32: #{tpu_custom_call.1} parent=27 // pred_fallthru
          _
      $region28: #{tpu_custom_call.1} parent=5 // pred_fallthru
        _
      %p178 = scmp.le.s32.totalorder 1, %s13
      %p179 = scmp.lt.s32.totalorder %s13, 3
      %p180 = pnand %p178, %p179
      %p181 = pneg %p180
      // Predicated region
      $region33: #{tpu_custom_call.1} parent=5 // pred_check
        _
      $region34: #{tpu_custom_call.1} parent=5 // pred_check_branch
        %183 = sbr.rel (%p180) target = $region36
      $region35: #{tpu_custom_call.1} parent=5 // pred_region
        %s184 = ssub.s32 %s13, 1
        %s185 = sand.u32 %s26, 1
        %s186 = scalar_lea.sflag [#allocation3], %s185
        %s187 = sand.u32 %s26, 1
        %s188 = smul.addr %s187, 128
        %s189 = scalar_lea.vmem [#allocation2], %s188
        // Predicated region
        $region37: #{tpu_custom_call.1} parent=35 // pred_check
          %p190 = pneg %p39
        $region38: #{tpu_custom_call.1} parent=35 // pred_check_branch
          %192 = sbr.rel (%p190) target = $region40
        $region39: #{tpu_custom_call.1} parent=35 // pred_region
          %194 = dma.done %s186, 2048
        $region40: #{tpu_custom_call.1} parent=35 // pred_fallthru
          _
        %s195 = sand.u32 %s26, 1
        %s196 = scalar_lea.sflag [#allocation3], %s195
        %s197 = sand.u32 %s26, 1
        %s198 = smul.addr %s197, 128
        %s199 = scalar_lea.vmem [#allocation2], %s198
        %p200 = pneg %p39
        %p201 = pneg %p36
        %p202 = pneg %p60
        %p203 = pneg %p57
        %p204 = pneg %p81
        %p205 = pneg %p78
        %p206 = pneg %p102
        %p207 = pneg %p99
        %p208 = pneg %p128
        %p209 = pneg %p125
        %s210 = smul.u32 16, %s18
        %p211 = scmp.lt.s32.totalorder %s210, 31
        %s212 = scalar_select %p211, %s210, 31
        %s213 = smul.addr %s212, 8
        %s214 = scalar_lea.vmem %s4, %s213
        %s215 = smul.u32 16, %s18
        %s216 = smul.u32 16, %s18
        %p217 = scmp.lt.s32.totalorder %s216, 31
        %s218 = scalar_select %p217, %s216, 31
        %s219 = smul.addr %s218, 8
        %s220 = scalar_lea.vmem %s4, %s219
        %s221 = smul.u32 16, %s18
        %v222 = vld [vmem:[%s189] sm:$0xff]
        %v223 = vld [vmem:[%s189 + $0x8] sm:$0xff]
        %v224 = vld [vmem:[%s189 + $0x10] sm:$0xff]
        %v225 = vld [vmem:[%s189 + $0x18] sm:$0xff]
        %v226 = vld [vmem:[%s189 + $0x20] sm:$0xff]
        %v227 = vld [vmem:[%s189 + $0x28] sm:$0xff]
        %v228 = vld [vmem:[%s189 + $0x30] sm:$0xff]
        %v229 = vld [vmem:[%s189 + $0x38] sm:$0xff]
        %v230 = vld [vmem:[%s189 + $0x40] sm:$0xff]
        %v231 = vld [vmem:[%s189 + $0x48] sm:$0xff]
        %v232 = vld [vmem:[%s189 + $0x50] sm:$0xff]
        %v233 = vld [vmem:[%s189 + $0x58] sm:$0xff]
        %v234 = vld [vmem:[%s189 + $0x60] sm:$0xff]
        %v235 = vld [vmem:[%s189 + $0x68] sm:$0xff]
        %v236 = vld [vmem:[%s189 + $0x70] sm:$0xff]
        %v237 = vld [vmem:[%s189 + $0x78] sm:$0xff]
        %v238 = vld [vmem:[%s1] sm:$0xff]
        %v239 = vld [vmem:[%s1 + $0x8] sm:$0xff]
        %v240 = vld [vmem:[%s1 + $0x10] sm:$0xff]
        %v241 = vld [vmem:[%s1 + $0x18] sm:$0xff]
        %v242 = vld [vmem:[%s1 + $0x20] sm:$0xff]
        %v243 = vld [vmem:[%s1 + $0x28] sm:$0xff]
        %v244 = vld [vmem:[%s1 + $0x30] sm:$0xff]
        %v245 = vld [vmem:[%s1 + $0x38] sm:$0xff]
        %v246 = vld [vmem:[%s1 + $0x40] sm:$0xff]
        %v247 = vld [vmem:[%s1 + $0x48] sm:$0xff]
        %v248 = vld [vmem:[%s1 + $0x50] sm:$0xff]
        %v249 = vld [vmem:[%s1 + $0x58] sm:$0xff]
        %v250 = vld [vmem:[%s1 + $0x60] sm:$0xff]
        %v251 = vld [vmem:[%s1 + $0x68] sm:$0xff]
        %v252 = vld [vmem:[%s1 + $0x70] sm:$0xff]
        %v253 = vld [vmem:[%s1 + $0x78] sm:$0xff]
        %v254 = vld [vmem:[%s2] sm:$0x1]
        %v256 = vperm.slane %v254, 0
        %258 = vmatpush.msra.mxu0 %v253
        %259 = vmatpush.msra.mxu0 %v252
        %260 = vmatpush.msra.mxu0 %v251
        %261 = vmatpush.msra.mxu0 %v250
        %262 = vmatpush.msra.mxu0 %v249
        %263 = vmatpush.msra.mxu0 %v248
        %264 = vmatpush.msra.mxu0 %v247
        %265 = vmatpush.msra.mxu0 %v246
        %266 = vmatpush.msra.mxu0 %v245
        %267 = vmatpush.msra.mxu0 %v244
        %268 = vmatpush.msra.mxu0 %v243
        %269 = vmatpush.msra.mxu0 %v242
        %270 = vmatpush.msra.mxu0 %v241
        %271 = vmatpush.msra.mxu0 %v240
        %272 = vmatpush.msra.mxu0 %v239
        %273 = vmatpush.msra.mxu0 %v238
        %274 = vmatmul.f32.gmra.mxu0 %v222
        %v275 = vpop.f32.mrf.mxu0
        %v276 = vadd.f32 %v256, %v275
        %277 = vmatmul.f32.gmra.mxu0 %v223
        %v278 = vpop.f32.mrf.mxu0
        %v279 = vadd.f32 %v256, %v278
        %280 = vmatmul.f32.gmra.mxu0 %v224
        %v281 = vpop.f32.mrf.mxu0
        %v282 = vadd.f32 %v256, %v281
        %283 = vmatmul.f32.gmra.mxu0 %v225
        %v284 = vpop.f32.mrf.mxu0
        %v285 = vadd.f32 %v256, %v284
        %286 = vmatmul.f32.gmra.mxu0 %v226
        %v287 = vpop.f32.mrf.mxu0
        %v288 = vadd.f32 %v256, %v287
        %289 = vmatmul.f32.gmra.mxu0 %v227
        %v290 = vpop.f32.mrf.mxu0
        %v291 = vadd.f32 %v256, %v290
        %292 = vmatmul.f32.gmra.mxu0 %v228
        %v293 = vpop.f32.mrf.mxu0
        %v294 = vadd.f32 %v256, %v293
        %295 = vmatmul.f32.gmra.mxu0 %v229
        %v296 = vpop.f32.mrf.mxu0
        %v297 = vadd.f32 %v256, %v296
        %298 = vmatmul.f32.gmra.mxu0 %v230
        %v299 = vpop.f32.mrf.mxu0
        %v300 = vadd.f32 %v256, %v299
        %301 = vmatmul.f32.gmra.mxu0 %v231
        %v302 = vpop.f32.mrf.mxu0
        %v303 = vadd.f32 %v256, %v302
        %304 = vmatmul.f32.gmra.mxu0 %v232
        %v305 = vpop.f32.mrf.mxu0
        %v306 = vadd.f32 %v256, %v305
        %307 = vmatmul.f32.gmra.mxu0 %v233
        %v308 = vpop.f32.mrf.mxu0
        %v309 = vadd.f32 %v256, %v308
        %310 = vmatmul.f32.gmra.mxu0 %v234
        %v311 = vpop.f32.mrf.mxu0
        %v312 = vadd.f32 %v256, %v311
        %313 = vmatmul.f32.gmra.mxu0 %v235
        %v314 = vpop.f32.mrf.mxu0
        %v315 = vadd.f32 %v256, %v314
        %316 = vmatmul.f32.gmra.mxu0 %v236
        %v317 = vpop.f32.mrf.mxu0
        %v318 = vadd.f32 %v256, %v317
        %319 = vmatmul.f32.gmra.mxu0 %v237
        %v320 = vpop.f32.mrf.mxu0
        %v321 = vadd.f32 %v256, %v320
        %322 = vdwg.mxu0
        %v323 = vxor.u32 %v276, 2147483648
        %v324 = vxor.u32 %v279, 2147483648
        %v325 = vxor.u32 %v282, 2147483648
        %v326 = vxor.u32 %v285, 2147483648
        %v327 = vxor.u32 %v288, 2147483648
        %v328 = vxor.u32 %v291, 2147483648
        %v329 = vxor.u32 %v294, 2147483648
        %v330 = vxor.u32 %v297, 2147483648
        %v331 = vxor.u32 %v300, 2147483648
        %v332 = vxor.u32 %v303, 2147483648
        %v333 = vxor.u32 %v306, 2147483648
        %v334 = vxor.u32 %v309, 2147483648
        %v335 = vxor.u32 %v312, 2147483648
        %v336 = vxor.u32 %v315, 2147483648
        %v337 = vxor.u32 %v318, 2147483648
        %v338 = vxor.u32 %v321, 2147483648
        %v339 = vmul.f32 %v323, 1.442695
        %v340 = vpow.pop %v339
        %v341 = vmul.f32 %v324, 1.442695
        %v342 = vpow.pop %v341
        %v343 = vmul.f32 %v325, 1.442695
        %v344 = vpow.pop %v343
        %v345 = vmul.f32 %v326, 1.442695
        %v346 = vpow.pop %v345
        %v347 = vmul.f32 %v327, 1.442695
        %v348 = vpow.pop %v347
        %v349 = vmul.f32 %v328, 1.442695
        %v350 = vpow.pop %v349
        %v351 = vmul.f32 %v329, 1.442695
        %v352 = vpow.pop %v351
        %v353 = vmul.f32 %v330, 1.442695
        %v354 = vpow.pop %v353
        %v355 = vmul.f32 %v331, 1.442695
        %v356 = vpow.pop %v355
        %v357 = vmul.f32 %v332, 1.442695
        %v358 = vpow.pop %v357
        %v359 = vmul.f32 %v333, 1.442695
        %v360 = vpow.pop %v359
        %v361 = vmul.f32 %v334, 1.442695
        %v362 = vpow.pop %v361
        %v363 = vmul.f32 %v335, 1.442695
        %v364 = vpow.pop %v363
        %v365 = vmul.f32 %v336, 1.442695
        %v366 = vpow.pop %v365
        %v367 = vmul.f32 %v337, 1.442695
        %v368 = vpow.pop %v367
        %v369 = vmul.f32 %v338, 1.442695
        %v370 = vpow.pop %v369
        %v371 = vadd.f32 %v340, 1.0
        %v372 = vadd.f32 %v342, 1.0
        %v373 = vadd.f32 %v344, 1.0
        %v374 = vadd.f32 %v346, 1.0
        %v375 = vadd.f32 %v348, 1.0
        %v376 = vadd.f32 %v350, 1.0
        %v377 = vadd.f32 %v352, 1.0
        %v378 = vadd.f32 %v354, 1.0
        %v379 = vadd.f32 %v356, 1.0
        %v380 = vadd.f32 %v358, 1.0
        %v381 = vadd.f32 %v360, 1.0
        %v382 = vadd.f32 %v362, 1.0
        %v383 = vadd.f32 %v364, 1.0
        %v384 = vadd.f32 %v366, 1.0
        %v385 = vadd.f32 %v368, 1.0
        %v386 = vadd.f32 %v370, 1.0
        %v387 = vrcp.pop %v371
        %v388 = vmul.f32 %v371, %v387
        %v389 = vsub.f32 1.0, %v388
        %v390 = vmul.f32 %v387, %v389
        %v391 = vadd.f32 %v387, %v390
        %vm392 = vweird.f32 %v371
        %vm393 = vweird.f32 %v387
        %vm394 = vmor %vm392, %vm393
        %v395 = vsel %vm394, %v387, %v391
        %v396 = vand.u32 2147483647, %v371
        %vm397 = vcmp.eq.f32.partialorder %v396, 8.507059e+37
        %v398 = vand.u32 %v371, 2147483648
        %v399 = vor.u32 1.1754944e-38, %v398
        %v400 = vsel %vm397, %v399, %v395
        %v401 = vmul.f32 1.0, %v400
        %v402 = vrcp.pop %v372
        %v403 = vmul.f32 %v372, %v402
        %v404 = vsub.f32 1.0, %v403
        %v405 = vmul.f32 %v402, %v404
        %v406 = vadd.f32 %v402, %v405
        %vm407 = vweird.f32 %v372
        %vm408 = vweird.f32 %v402
        %vm409 = vmor %vm407, %vm408
        %v410 = vsel %vm409, %v402, %v406
        %v411 = vand.u32 2147483647, %v372
        %vm412 = vcmp.eq.f32.partialorder %v411, 8.507059e+37
        %v413 = vand.u32 %v372, 2147483648
        %v414 = vor.u32 1.1754944e-38, %v413
        %v415 = vsel %vm412, %v414, %v410
        %v416 = vmul.f32 1.0, %v415
        %v417 = vrcp.pop %v373
        %v418 = vmul.f32 %v373, %v417
        %v419 = vsub.f32 1.0, %v418
        %v420 = vmul.f32 %v417, %v419
        %v421 = vadd.f32 %v417, %v420
        %vm422 = vweird.f32 %v373
        %vm423 = vweird.f32 %v417
        %vm424 = vmor %vm422, %vm423
        %v425 = vsel %vm424, %v417, %v421
        %v426 = vand.u32 2147483647, %v373
        %vm427 = vcmp.eq.f32.partialorder %v426, 8.507059e+37
        %v428 = vand.u32 %v373, 2147483648
        %v429 = vor.u32 1.1754944e-38, %v428
        %v430 = vsel %vm427, %v429, %v425
        %v431 = vmul.f32 1.0, %v430
        %v432 = vrcp.pop %v374
        %v433 = vmul.f32 %v374, %v432
        %v434 = vsub.f32 1.0, %v433
        %v435 = vmul.f32 %v432, %v434
        %v436 = vadd.f32 %v432, %v435
        %vm437 = vweird.f32 %v374
        %vm438 = vweird.f32 %v432
        %vm439 = vmor %vm437, %vm438
        %v440 = vsel %vm439, %v432, %v436
        %v441 = vand.u32 2147483647, %v374
        %vm442 = vcmp.eq.f32.partialorder %v441, 8.507059e+37
        %v443 = vand.u32 %v374, 2147483648
        %v444 = vor.u32 1.1754944e-38, %v443
        %v445 = vsel %vm442, %v444, %v440
        %v446 = vmul.f32 1.0, %v445
        %v447 = vrcp.pop %v375
        %v448 = vmul.f32 %v375, %v447
        %v449 = vsub.f32 1.0, %v448
        %v450 = vmul.f32 %v447, %v449
        %v451 = vadd.f32 %v447, %v450
        %vm452 = vweird.f32 %v375
        %vm453 = vweird.f32 %v447
        %vm454 = vmor %vm452, %vm453
        %v455 = vsel %vm454, %v447, %v451
        %v456 = vand.u32 2147483647, %v375
        %vm457 = vcmp.eq.f32.partialorder %v456, 8.507059e+37
        %v458 = vand.u32 %v375, 2147483648
        %v459 = vor.u32 1.1754944e-38, %v458
        %v460 = vsel %vm457, %v459, %v455
        %v461 = vmul.f32 1.0, %v460
        %v462 = vrcp.pop %v376
        %v463 = vmul.f32 %v376, %v462
        %v464 = vsub.f32 1.0, %v463
        %v465 = vmul.f32 %v462, %v464
        %v466 = vadd.f32 %v462, %v465
        %vm467 = vweird.f32 %v376
        %vm468 = vweird.f32 %v462
        %vm469 = vmor %vm467, %vm468
        %v470 = vsel %vm469, %v462, %v466
        %v471 = vand.u32 2147483647, %v376
        %vm472 = vcmp.eq.f32.partialorder %v471, 8.507059e+37
        %v473 = vand.u32 %v376, 2147483648
        %v474 = vor.u32 1.1754944e-38, %v473
        %v475 = vsel %vm472, %v474, %v470
        %v476 = vmul.f32 1.0, %v475
        %v477 = vrcp.pop %v377
        %v478 = vmul.f32 %v377, %v477
        %v479 = vsub.f32 1.0, %v478
        %v480 = vmul.f32 %v477, %v479
        %v481 = vadd.f32 %v477, %v480
        %vm482 = vweird.f32 %v377
        %vm483 = vweird.f32 %v477
        %vm484 = vmor %vm482, %vm483
        %v485 = vsel %vm484, %v477, %v481
        %v486 = vand.u32 2147483647, %v377
        %vm487 = vcmp.eq.f32.partialorder %v486, 8.507059e+37
        %v488 = vand.u32 %v377, 2147483648
        %v489 = vor.u32 1.1754944e-38, %v488
        %v490 = vsel %vm487, %v489, %v485
        %v491 = vmul.f32 1.0, %v490
        %v492 = vrcp.pop %v378
        %v493 = vmul.f32 %v378, %v492
        %v494 = vsub.f32 1.0, %v493
        %v495 = vmul.f32 %v492, %v494
        %v496 = vadd.f32 %v492, %v495
        %vm497 = vweird.f32 %v378
        %vm498 = vweird.f32 %v492
        %vm499 = vmor %vm497, %vm498
        %v500 = vsel %vm499, %v492, %v496
        %v501 = vand.u32 2147483647, %v378
        %vm502 = vcmp.eq.f32.partialorder %v501, 8.507059e+37
        %v503 = vand.u32 %v378, 2147483648
        %v504 = vor.u32 1.1754944e-38, %v503
        %v505 = vsel %vm502, %v504, %v500
        %v506 = vmul.f32 1.0, %v505
        %v507 = vrcp.pop %v379
        %v508 = vmul.f32 %v379, %v507
        %v509 = vsub.f32 1.0, %v508
        %v510 = vmul.f32 %v507, %v509
        %v511 = vadd.f32 %v507, %v510
        %vm512 = vweird.f32 %v379
        %vm513 = vweird.f32 %v507
        %vm514 = vmor %vm512, %vm513
        %v515 = vsel %vm514, %v507, %v511
        %v516 = vand.u32 2147483647, %v379
        %vm517 = vcmp.eq.f32.partialorder %v516, 8.507059e+37
        %v518 = vand.u32 %v379, 2147483648
        %v519 = vor.u32 1.1754944e-38, %v518
        %v520 = vsel %vm517, %v519, %v515
        %v521 = vmul.f32 1.0, %v520
        %v522 = vrcp.pop %v380
        %v523 = vmul.f32 %v380, %v522
        %v524 = vsub.f32 1.0, %v523
        %v525 = vmul.f32 %v522, %v524
        %v526 = vadd.f32 %v522, %v525
        %vm527 = vweird.f32 %v380
        %vm528 = vweird.f32 %v522
        %vm529 = vmor %vm527, %vm528
        %v530 = vsel %vm529, %v522, %v526
        %v531 = vand.u32 2147483647, %v380
        %vm532 = vcmp.eq.f32.partialorder %v531, 8.507059e+37
        %v533 = vand.u32 %v380, 2147483648
        %v534 = vor.u32 1.1754944e-38, %v533
        %v535 = vsel %vm532, %v534, %v530
        %v536 = vmul.f32 1.0, %v535
        %v537 = vrcp.pop %v381
        %v538 = vmul.f32 %v381, %v537
        %v539 = vsub.f32 1.0, %v538
        %v540 = vmul.f32 %v537, %v539
        %v541 = vadd.f32 %v537, %v540
        %vm542 = vweird.f32 %v381
        %vm543 = vweird.f32 %v537
        %vm544 = vmor %vm542, %vm543
        %v545 = vsel %vm544, %v537, %v541
        %v546 = vand.u32 2147483647, %v381
        %vm547 = vcmp.eq.f32.partialorder %v546, 8.507059e+37
        %v548 = vand.u32 %v381, 2147483648
        %v549 = vor.u32 1.1754944e-38, %v548
        %v550 = vsel %vm547, %v549, %v545
        %v551 = vmul.f32 1.0, %v550
        %v552 = vrcp.pop %v382
        %v553 = vmul.f32 %v382, %v552
        %v554 = vsub.f32 1.0, %v553
        %v555 = vmul.f32 %v552, %v554
        %v556 = vadd.f32 %v552, %v555
        %vm557 = vweird.f32 %v382
        %vm558 = vweird.f32 %v552
        %vm559 = vmor %vm557, %vm558
        %v560 = vsel %vm559, %v552, %v556
        %v561 = vand.u32 2147483647, %v382
        %vm562 = vcmp.eq.f32.partialorder %v561, 8.507059e+37
        %v563 = vand.u32 %v382, 2147483648
        %v564 = vor.u32 1.1754944e-38, %v563
        %v565 = vsel %vm562, %v564, %v560
        %v566 = vmul.f32 1.0, %v565
        %v567 = vrcp.pop %v383
        %v568 = vmul.f32 %v383, %v567
        %v569 = vsub.f32 1.0, %v568
        %v570 = vmul.f32 %v567, %v569
        %v571 = vadd.f32 %v567, %v570
        %vm572 = vweird.f32 %v383
        %vm573 = vweird.f32 %v567
        %vm574 = vmor %vm572, %vm573
        %v575 = vsel %vm574, %v567, %v571
        %v576 = vand.u32 2147483647, %v383
        %vm577 = vcmp.eq.f32.partialorder %v576, 8.507059e+37
        %v578 = vand.u32 %v383, 2147483648
        %v579 = vor.u32 1.1754944e-38, %v578
        %v580 = vsel %vm577, %v579, %v575
        %v581 = vmul.f32 1.0, %v580
        %v582 = vrcp.pop %v384
        %v583 = vmul.f32 %v384, %v582
        %v584 = vsub.f32 1.0, %v583
        %v585 = vmul.f32 %v582, %v584
        %v586 = vadd.f32 %v582, %v585
        %vm587 = vweird.f32 %v384
        %vm588 = vweird.f32 %v582
        %vm589 = vmor %vm587, %vm588
        %v590 = vsel %vm589, %v582, %v586
        %v591 = vand.u32 2147483647, %v384
        %vm592 = vcmp.eq.f32.partialorder %v591, 8.507059e+37
        %v593 = vand.u32 %v384, 2147483648
        %v594 = vor.u32 1.1754944e-38, %v593
        %v595 = vsel %vm592, %v594, %v590
        %v596 = vmul.f32 1.0, %v595
        %v597 = vrcp.pop %v385
        %v598 = vmul.f32 %v385, %v597
        %v599 = vsub.f32 1.0, %v598
        %v600 = vmul.f32 %v597, %v599
        %v601 = vadd.f32 %v597, %v600
        %vm602 = vweird.f32 %v385
        %vm603 = vweird.f32 %v597
        %vm604 = vmor %vm602, %vm603
        %v605 = vsel %vm604, %v597, %v601
        %v606 = vand.u32 2147483647, %v385
        %vm607 = vcmp.eq.f32.partialorder %v606, 8.507059e+37
        %v608 = vand.u32 %v385, 2147483648
        %v609 = vor.u32 1.1754944e-38, %v608
        %v610 = vsel %vm607, %v609, %v605
        %v611 = vmul.f32 1.0, %v610
        %v612 = vrcp.pop %v386
        %v613 = vmul.f32 %v386, %v612
        %v614 = vsub.f32 1.0, %v613
        %v615 = vmul.f32 %v612, %v614
        %v616 = vadd.f32 %v612, %v615
        %vm617 = vweird.f32 %v386
        %vm618 = vweird.f32 %v612
        %vm619 = vmor %vm617, %vm618
        %v620 = vsel %vm619, %v612, %v616
        %v621 = vand.u32 2147483647, %v386
        %vm622 = vcmp.eq.f32.partialorder %v621, 8.507059e+37
        %v623 = vand.u32 %v386, 2147483648
        %v624 = vor.u32 1.1754944e-38, %v623
        %v625 = vsel %vm622, %v624, %v620
        %v626 = vmul.f32 1.0, %v625
        %v627 = vmul.f32 %v276, %v401
        %v628 = vmul.f32 %v279, %v416
        %v629 = vmul.f32 %v282, %v431
        %v630 = vmul.f32 %v285, %v446
        %v631 = vmul.f32 %v288, %v461
        %v632 = vmul.f32 %v291, %v476
        %v633 = vmul.f32 %v294, %v491
        %v634 = vmul.f32 %v297, %v506
        %v635 = vmul.f32 %v300, %v521
        %v636 = vmul.f32 %v303, %v536
        %v637 = vmul.f32 %v306, %v551
        %v638 = vmul.f32 %v309, %v566
        %v639 = vmul.f32 %v312, %v581
        %v640 = vmul.f32 %v315, %v596
        %v641 = vmul.f32 %v318, %v611
        %v642 = vmul.f32 %v321, %v626
        %v643 = vld [vmem:[%s3] sm:$0xff]
        %v644 = vld [vmem:[%s3 + $0x8] sm:$0xff]
        %vm645 = vcmask 130048
        %v647 = vsel %vm645, %v627, 0
        %v650 = vsel %vm645, %v628, 0
        %v653 = vsel %vm645, %v629, 0
        %v656 = vsel %vm645, %v630, 0
        %v659 = vsel %vm645, %v631, 0
        %v662 = vsel %vm645, %v632, 0
        %v665 = vsel %vm645, %v633, 0
        %v668 = vsel %vm645, %v634, 0
        %v671 = vsel %vm645, %v635, 0
        %v674 = vsel %vm645, %v636, 0
        %v677 = vsel %vm645, %v637, 0
        %v680 = vsel %vm645, %v638, 0
        %v683 = vsel %vm645, %v639, 0
        %v686 = vsel %vm645, %v640, 0
        %v689 = vsel %vm645, %v641, 0
        %v692 = vsel %vm645, %v642, 0
        %694 = vmatpush.msra.mxu0 0.0
        %695 = vmatpush.msra.mxu0 0.0
        %696 = vmatpush.msra.mxu0 0.0
        %697 = vmatpush.msra.mxu0 0.0
        %698 = vmatpush.msra.mxu0 0.0
        %699 = vmatpush.msra.mxu0 0.0
        %700 = vmatpush.msra.mxu0 0.0
        %701 = vmatpush.msra.mxu0 0.0
        %702 = vmatpush.msra.mxu0 0.0
        %703 = vmatpush.msra.mxu0 0.0
        %704 = vmatpush.msra.mxu0 0.0
        %705 = vmatpush.msra.mxu0 0.0
        %706 = vmatpush.msra.mxu0 0.0
        %707 = vmatpush.msra.mxu0 0.0
        %708 = vmatpush.msra.mxu0 %v644
        %709 = vmatpush.msra.mxu0 %v643
        %710 = vmatmul.f32.gmra.mxu0 %v647
        %v711 = vpop.f32.mrf.mxu0
        %v712 = vadd.f32 0.0, %v711
        %713 = vmatmul.f32.gmra.mxu0 %v650
        %v714 = vpop.f32.mrf.mxu0
        %v715 = vadd.f32 0.0, %v714
        %716 = vmatmul.f32.gmra.mxu0 %v653
        %v717 = vpop.f32.mrf.mxu0
        %v718 = vadd.f32 0.0, %v717
        %719 = vmatmul.f32.gmra.mxu0 %v656
        %v720 = vpop.f32.mrf.mxu0
        %v721 = vadd.f32 0.0, %v720
        %722 = vmatmul.f32.gmra.mxu0 %v659
        %v723 = vpop.f32.mrf.mxu0
        %v724 = vadd.f32 0.0, %v723
        %725 = vmatmul.f32.gmra.mxu0 %v662
        %v726 = vpop.f32.mrf.mxu0
        %v727 = vadd.f32 0.0, %v726
        %728 = vmatmul.f32.gmra.mxu0 %v665
        %v729 = vpop.f32.mrf.mxu0
        %v730 = vadd.f32 0.0, %v729
        %731 = vmatmul.f32.gmra.mxu0 %v668
        %v732 = vpop.f32.mrf.mxu0
        %v733 = vadd.f32 0.0, %v732
        %734 = vmatmul.f32.gmra.mxu0 %v671
        %v735 = vpop.f32.mrf.mxu0
        %v736 = vadd.f32 0.0, %v735
        %737 = vmatmul.f32.gmra.mxu0 %v674
        %v738 = vpop.f32.mrf.mxu0
        %v739 = vadd.f32 0.0, %v738
        %740 = vmatmul.f32.gmra.mxu0 %v677
        %v741 = vpop.f32.mrf.mxu0
        %v742 = vadd.f32 0.0, %v741
        %743 = vmatmul.f32.gmra.mxu0 %v680
        %v744 = vpop.f32.mrf.mxu0
        %v745 = vadd.f32 0.0, %v744
        %746 = vmatmul.f32.gmra.mxu0 %v683
        %v747 = vpop.f32.mrf.mxu0
        %v748 = vadd.f32 0.0, %v747
        %749 = vmatmul.f32.gmra.mxu0 %v686
        %v750 = vpop.f32.mrf.mxu0
        %v751 = vadd.f32 0.0, %v750
        %752 = vmatmul.f32.gmra.mxu0 %v689
        %v753 = vpop.f32.mrf.mxu0
        %v754 = vadd.f32 0.0, %v753
        %755 = vmatmul.f32.gmra.mxu0 %v692
        %v756 = vpop.f32.mrf.mxu0
        %v757 = vadd.f32 0.0, %v756
        %758 = vdwg.mxu0
        %775 = vrot.lane.b32.xlu0 %v712, 32
        %v776 = vpop.permute.xlu0 %775
        %777 = vrot.lane.b32.xlu0 %v715, 32
        %v778 = vpop.permute.xlu0 %777
        %779 = vrot.lane.b32.xlu0 %v718, 32
        %v780 = vpop.permute.xlu0 %779
        %781 = vrot.lane.b32.xlu0 %v721, 32
        %v782 = vpop.permute.xlu0 %781
        %783 = vrot.lane.b32.xlu0 %v724, 32
        %v784 = vpop.permute.xlu0 %783
        %785 = vrot.lane.b32.xlu0 %v727, 32
        %v786 = vpop.permute.xlu0 %785
        %787 = vrot.lane.b32.xlu0 %v730, 32
        %v788 = vpop.permute.xlu0 %787
        %789 = vrot.lane.b32.xlu0 %v733, 32
        %v790 = vpop.permute.xlu0 %789
        %791 = vrot.lane.b32.xlu0 %v736, 32
        %v792 = vpop.permute.xlu0 %791
        %793 = vrot.lane.b32.xlu0 %v739, 32
        %v794 = vpop.permute.xlu0 %793
        %795 = vrot.lane.b32.xlu0 %v742, 32
        %v796 = vpop.permute.xlu0 %795
        %797 = vrot.lane.b32.xlu0 %v745, 32
        %v798 = vpop.permute.xlu0 %797
        %799 = vrot.lane.b32.xlu0 %v748, 32
        %v800 = vpop.permute.xlu0 %799
        %801 = vrot.lane.b32.xlu0 %v751, 32
        %v802 = vpop.permute.xlu0 %801
        %803 = vrot.lane.b32.xlu0 %v754, 32
        %v804 = vpop.permute.xlu0 %803
        %805 = vrot.lane.b32.xlu0 %v757, 32
        %v806 = vpop.permute.xlu0 %805
        %v823 = vmul.f32 %v222, %v776
        %v824 = vmul.f32 %v223, %v778
        %v825 = vmul.f32 %v224, %v780
        %v826 = vmul.f32 %v225, %v782
        %v827 = vmul.f32 %v226, %v784
        %v828 = vmul.f32 %v227, %v786
        %v829 = vmul.f32 %v228, %v788
        %v830 = vmul.f32 %v229, %v790
        %v831 = vmul.f32 %v230, %v792
        %v832 = vmul.f32 %v231, %v794
        %v833 = vmul.f32 %v232, %v796
        %v834 = vmul.f32 %v233, %v798
        %v835 = vmul.f32 %v234, %v800
        %v836 = vmul.f32 %v235, %v802
        %v837 = vmul.f32 %v236, %v804
        %v838 = vmul.f32 %v237, %v806
        %855 = vrot.lane.b32.xlu0 %v823, 96
        %v856 = vpop.permute.xlu0 %855
        %857 = vrot.lane.b32.xlu0 %v824, 96
        %v858 = vpop.permute.xlu0 %857
        %859 = vrot.lane.b32.xlu0 %v825, 96
        %v860 = vpop.permute.xlu0 %859
        %861 = vrot.lane.b32.xlu0 %v826, 96
        %v862 = vpop.permute.xlu0 %861
        %863 = vrot.lane.b32.xlu0 %v827, 96
        %v864 = vpop.permute.xlu0 %863
        %865 = vrot.lane.b32.xlu0 %v828, 96
        %v866 = vpop.permute.xlu0 %865
        %867 = vrot.lane.b32.xlu0 %v829, 96
        %v868 = vpop.permute.xlu0 %867
        %869 = vrot.lane.b32.xlu0 %v830, 96
        %v870 = vpop.permute.xlu0 %869
        %871 = vrot.lane.b32.xlu0 %v831, 96
        %v872 = vpop.permute.xlu0 %871
        %873 = vrot.lane.b32.xlu0 %v832, 96
        %v874 = vpop.permute.xlu0 %873
        %875 = vrot.lane.b32.xlu0 %v833, 96
        %v876 = vpop.permute.xlu0 %875
        %877 = vrot.lane.b32.xlu0 %v834, 96
        %v878 = vpop.permute.xlu0 %877
        %879 = vrot.lane.b32.xlu0 %v835, 96
        %v880 = vpop.permute.xlu0 %879
        %881 = vrot.lane.b32.xlu0 %v836, 96
        %v882 = vpop.permute.xlu0 %881
        %883 = vrot.lane.b32.xlu0 %v837, 96
        %v884 = vpop.permute.xlu0 %883
        %885 = vrot.lane.b32.xlu0 %v838, 96
        %v886 = vpop.permute.xlu0 %885
        %vm903 = vcmask 785408
        %904 = vst.msk [vmem:[%s220] sm:$0xff] %vm903, %v856
        %905 = vst.msk [vmem:[%s220 + $0x8] sm:$0xff] %vm903, %v858
        %906 = vst.msk [vmem:[%s220 + $0x10] sm:$0xff] %vm903, %v860
        %907 = vst.msk [vmem:[%s220 + $0x18] sm:$0xff] %vm903, %v862
        %908 = vst.msk [vmem:[%s220 + $0x20] sm:$0xff] %vm903, %v864
        %909 = vst.msk [vmem:[%s220 + $0x28] sm:$0xff] %vm903, %v866
        %910 = vst.msk [vmem:[%s220 + $0x30] sm:$0xff] %vm903, %v868
        %911 = vst.msk [vmem:[%s220 + $0x38] sm:$0xff] %vm903, %v870
        %912 = vst.msk [vmem:[%s220 + $0x40] sm:$0xff] %vm903, %v872
        %913 = vst.msk [vmem:[%s220 + $0x48] sm:$0xff] %vm903, %v874
        %914 = vst.msk [vmem:[%s220 + $0x50] sm:$0xff] %vm903, %v876
        %915 = vst.msk [vmem:[%s220 + $0x58] sm:$0xff] %vm903, %v878
        %916 = vst.msk [vmem:[%s220 + $0x60] sm:$0xff] %vm903, %v880
        %917 = vst.msk [vmem:[%s220 + $0x68] sm:$0xff] %vm903, %v882
        %918 = vst.msk [vmem:[%s220 + $0x70] sm:$0xff] %vm903, %v884
        %919 = vst.msk [vmem:[%s220 + $0x78] sm:$0xff] %vm903, %v886
        %s920 = smul.u32 16, %s18
        %p921 = scmp.lt.s32.totalorder %s920, 31
        %s922 = scalar_select %p921, %s920, 31
        %s923 = smul.addr %s922, 8
        %s924 = scalar_lea.vmem %s4, %s923
        // Predicated region
        $region41: #{tpu_custom_call.1} parent=35 // pred_check
          %p925 = pneg %p125
        $region42: #{tpu_custom_call.1} parent=35 // pred_check_branch
          %927 = sbr.rel (%p925) target = $region44
        $region43: #{tpu_custom_call.1} parent=35 // pred_region
          %s928 = smul.u32 16, %s18
        $region44: #{tpu_custom_call.1} parent=35 // pred_fallthru
          _
      $region36: #{tpu_custom_call.1} parent=5 // pred_fallthru
        _
      %p929 = scmp.le.s32.totalorder 2, %s13
      // Predicated region
      $region45: #{tpu_custom_call.1} parent=5 // pred_check
        %p930 = pneg %p929
      $region46: #{tpu_custom_call.1} parent=5 // pred_check_branch
        %932 = sbr.rel (%p930) target = $region48
      $region47: #{tpu_custom_call.1} parent=5 // pred_region
        %s933 = ssub.s32 %s13, 2
        // Predicated region
        $region49: #{tpu_custom_call.1} parent=47 // pred_check
          %p934 = pneg %p131
        $region50: #{tpu_custom_call.1} parent=47 // pred_check_branch
          %936 = sbr.rel (%p934) target = $region52
        $region51: #{tpu_custom_call.1} parent=47 // pred_region
          %s937 = smul.u32 16, %s19
          %p938 = scmp.lt.s32.totalorder %s937, 31
          %s939 = scalar_select %p938, %s937, 31
          %s940 = smul.addr %s939, 8
          %s941 = scalar_lea.vmem %s4, %s940
        $region52: #{tpu_custom_call.1} parent=47 // pred_fallthru
          _
      $region48: #{tpu_custom_call.1} parent=5 // pred_fallthru
        _
    $region6: #{tpu_custom_call.1} parent=1 // loop_footer
      %s17 = sadd.s32 1, %s13
    $region7: #{tpu_custom_call.1} parent=1 // loop_footer_branch
      %12 = sbr.rel target = $region3
    $region8: #{tpu_custom_call.1} parent=1 // loop_exit
      _
    %942 = vsyncpa [#allocation3], 1
    %s943 = scalar_lea.sflag [#allocation3], 1
    %944 = vsyncpa %s943, 1

</llo_original>
